<compile_context>
chip_gen: v7x
topology: tpu7x:2x2x1
jax: 0.10.0
libtpu: 0.0.40
codegen_flags: <defaults>
</compile_context>

<pallas_src>
import jax
import jax.numpy as jnp
from jax.experimental import pallas as pl
from jax.experimental.pallas import tpu as pltpu


def _normalize_kernel(x_ref, m_ref, s_ref, o_ref):
    # x_ref: (block_rows, block_cols); m_ref / s_ref: (block_rows, 1) float32.
    x = x_ref[...].astype(jnp.float32)
    mean = m_ref[...]
    inv_std = s_ref[...]
    o_ref[...] = ((x - mean) * inv_std).astype(o_ref.dtype)


def _pick_tile(dim, unit, max_tile):
    """Largest tile <= max_tile that is a multiple of `unit` and evenly divides
    `dim`; falls back to the full `dim` (always legal per BlockSpec rules)."""
    if dim <= max_tile:
        return dim
    cand = (max_tile // unit) * unit
    while cand >= unit:
        if dim % cand == 0:
            return cand
        cand -= unit
    return dim


def normalize(x, means, stds):
    """(x - means) / stds for NCHW `x`; means/stds are length-C per channel."""
    N, C, H, W = x.shape
    means = jnp.asarray(means, dtype=jnp.float32).reshape(C)
    inv_stds = (1.0 / jnp.asarray(stds, dtype=jnp.float32)).reshape(C)

    rows = N * C
    cols = H * W
    x2 = x.reshape(rows, cols)  # lane-dense 2-D view

    # Per-row (= per (n, c)) scale/shift; row index = n*C + c -> channel c.
    m_row = jnp.tile(means, N).reshape(rows, 1)
    s_row = jnp.tile(inv_stds, N).reshape(rows, 1)

    # ~2 MiB blocks: lane dim a multiple of 128, sublane dim a multiple of 8.
    itemsize = jnp.dtype(x.dtype).itemsize
    block_cols = _pick_tile(cols, 128, 2048)
    row_budget = max(8, (2 * 1024 * 1024) // (block_cols * itemsize))
    block_rows = _pick_tile(rows, 8, row_budget)

    grid = (rows // block_rows, cols // block_cols)

    out2 = pl.pallas_call(
        _normalize_kernel,
        out_shape=jax.ShapeDtypeStruct((rows, cols), x.dtype),
        grid=grid,
        in_specs=[
            pl.BlockSpec((block_rows, block_cols), lambda i, j: (i, j)),
            pl.BlockSpec((block_rows, 1), lambda i, j: (i, 0)),
            pl.BlockSpec((block_rows, 1), lambda i, j: (i, 0)),
        ],
        out_specs=pl.BlockSpec((block_rows, block_cols), lambda i, j: (i, j)),
        compiler_params=pltpu.CompilerParams(
            dimension_semantics=("parallel", "parallel"),
            vmem_limit_bytes=32 * 1024 * 1024,
        ),
    )(x2, m_row, s_row)

    return out2.reshape(N, C, H, W)


class Normalize:
    """JAX/Pallas port of tf_verify.convert_nets.Normalize."""

    def __init__(self, means, stds, channel_dim, dtype=jnp.float32):
        target_shape = 4 * [1]
        target_shape[channel_dim] = len(means)
        self.means = jnp.asarray(means, dtype=dtype).reshape(target_shape)
        self.stds = jnp.asarray(stds, dtype=dtype).reshape(target_shape)
        self.channel_dim = channel_dim

    def __call__(self, x):
        # The Pallas kernel assumes channel_dim == 1 (NCHW).
        assert self.channel_dim == 1, "kernel implemented for NCHW layout"
        C = self.means.shape[1]
        return normalize(x, self.means.reshape(C), self.stds.reshape(C))


if __name__ == "__main__":
    key = jax.random.PRNGKey(0)
    N, C, H, W = 2, 4, 16, 16

    x = jax.random.normal(key, (N, C, H, W), dtype=jnp.float32)

    # Deterministic synthetic normalization parameters (per-channel).
    means = [0.1, 0.2, 0.3, 0.4]
    stds = [0.5, 0.6, 0.7, 0.8]

    mod = Normalize(means, stds, channel_dim=1, dtype=jnp.float32)
    out = jax.block_until_ready(mod(x))

    # Reference check in plain JAX (true division).
    ref = (x - mod.means) / mod.stds
    assert out.shape == x.shape and out.dtype == x.dtype
    # Slightly loosened tolerance: multiply-by-precomputed-reciprocal differs
    # from true division by a few ULPs.
    assert jnp.allclose(out, ref, atol=1e-5, rtol=1e-5)

    print("KERNEL_OK")
</pallas_src>

<mosaic_0001>
module attributes {stable_mosaic.version = 11 : i64} {
  func.func @_normalize_kernel(%arg0: i32, %arg1: i32, %arg2: memref<8x256xf32, #tpu.memory_space<vmem>>, %arg3: memref<8x1xf32, #tpu.memory_space<vmem>>, %arg4: memref<8x1xf32, #tpu.memory_space<vmem>>, %arg5: memref<8x256xf32, #tpu.memory_space<vmem>>) attributes {dimension_semantics = [#tpu.dimension_semantics<parallel>, #tpu.dimension_semantics<parallel>], iteration_bounds = array<i64: 1, 1>, scalar_prefetch = 0 : i64, scratch_operands = 0 : i64, tpu.core_type = #tpu.core_type<tc>, window_params = [{transform_indices = @transform_0, window_bounds = array<i64: 8, 256>}, {transform_indices = @transform_1, window_bounds = array<i64: 8, 1>}, {transform_indices = @transform_2, window_bounds = array<i64: 8, 1>}, {transform_indices = @transform_3, window_bounds = array<i64: 8, 256>}]} {
    %c0 = arith.constant 0 : index
    %c0_0 = arith.constant 0 : index
    %0 = vector.load %arg2[%c0, %c0_0] : memref<8x256xf32, #tpu.memory_space<vmem>>, vector<8x256xf32>
    %c0_1 = arith.constant 0 : index
    %c0_2 = arith.constant 0 : index
    %1 = vector.load %arg3[%c0_1, %c0_2] : memref<8x1xf32, #tpu.memory_space<vmem>>, vector<8x1xf32>
    %c0_3 = arith.constant 0 : index
    %c0_4 = arith.constant 0 : index
    %2 = vector.load %arg4[%c0_3, %c0_4] : memref<8x1xf32, #tpu.memory_space<vmem>>, vector<8x1xf32>
    %3 = vector.broadcast %1 : vector<8x1xf32> to vector<8x256xf32>
    %4 = arith.subf %0, %3 : vector<8x256xf32>
    %5 = vector.broadcast %2 : vector<8x1xf32> to vector<8x256xf32>
    %6 = arith.mulf %4, %5 : vector<8x256xf32>
    %c0_5 = arith.constant 0 : index
    %c0_6 = arith.constant 0 : index
    %7 = vector.load %arg5[%c0_5, %c0_6] : memref<8x256xf32, #tpu.memory_space<vmem>>, vector<8x256xf32>
    tpu.vector_store %arg5[%c0_5, %c0_6], %6 {strides = array<i32>} : memref<8x256xf32, #tpu.memory_space<vmem>>, vector<8x256xf32>,
    return
  }
  func.func @transform_0(%arg0: i32, %arg1: i32) -> (i32, i32) {
    %c0_i32 = arith.constant 0 : i32
    return %arg0, %arg1 : i32, i32
  }
  func.func @transform_1(%arg0: i32, %arg1: i32) -> (i32, i32) {
    %c0_i32 = arith.constant 0 : i32
    %c0_i32_0 = arith.constant 0 : i32
    return %arg0, %c0_i32 : i32, i32
  }
  func.func @transform_2(%arg0: i32, %arg1: i32) -> (i32, i32) {
    %c0_i32 = arith.constant 0 : i32
    %c0_i32_0 = arith.constant 0 : i32
    return %arg0, %c0_i32 : i32, i32
  }
  func.func @transform_3(%arg0: i32, %arg1: i32) -> (i32, i32) {
    %c0_i32 = arith.constant 0 : i32
    return %arg0, %arg1 : i32, i32
  }
}

</mosaic_0001>

<llo_original>
// kernel: tpu_custom_call.1
$region0: #{tpu_custom_call.1}
  #allocation0 [shape = 'u32[]', space=smem, size = 0x4, offset = 0x4, fixed_abs, tag = 'smem constant byte address 0x4 - core index']
  #allocation1 [shape = 'u32[144,128]{1,0:T(1,128)}', space=vmem, size = 0x12000, scoped, tag = 'internal scratch']
  %s0 = inlined_call_operand.vmem [shape: f32[8,256], index: 0, kind: input, shape index: {}]
  %s1 = inlined_call_operand.vmem [shape: f32[8,1], index: 1, kind: input, shape index: {}]
  %s2 = inlined_call_operand.vmem [shape: f32[8,1], index: 2, kind: input, shape index: {}]
  %s3 = inlined_call_operand.hbm [shape: f32[8,256], index: 3, kind: output, shape index: {}]
  %s4 = sld [smem:[#allocation0]]
  $region22: #{tpu_custom_call.1} parent=0
    _
  %s6 = ssub.s32 1, %s4
  %s7 = scalar_select 0, %s6, %s4
  $region1: #{tpu_custom_call.1} parent=0
    #allocation2 [shape = 'u8[8192]{0}', space=vmem, size = 0x2000, scoped, tag = 'output window, operand 0, single buffered']
    #allocation3 [shape = 's32[1]{0}', space=sflag, size = 0x4, scoped, tag = 'scoped memory for tpu_custom_call.1']
    %8 = vsyncpa [#allocation3], 0
    // Predicated region
    $region2: #{tpu_custom_call.1} parent=1 // pred_check
      _
    $region3: #{tpu_custom_call.1} parent=1 // pred_check_branch
      %10 = sbr.rel (0) target = $region5
    $region4: #{tpu_custom_call.1} parent=1 // pred_region
      _
    $region5: #{tpu_custom_call.1} parent=1 // pred_fallthru
      _
    // Predicated region
    $region6: #{tpu_custom_call.1} parent=1 // pred_check
      _
    $region7: #{tpu_custom_call.1} parent=1 // pred_check_branch
      %12 = sbr.rel (0) target = $region9
    $region8: #{tpu_custom_call.1} parent=1 // pred_region
      _
    $region9: #{tpu_custom_call.1} parent=1 // pred_fallthru
      _
    // Predicated region
    $region10: #{tpu_custom_call.1} parent=1 // pred_check
      _
    $region11: #{tpu_custom_call.1} parent=1 // pred_check_branch
      %14 = sbr.rel (0) target = $region13
    $region12: #{tpu_custom_call.1} parent=1 // pred_region
      _
    $region13: #{tpu_custom_call.1} parent=1 // pred_fallthru
      _
    %v15 = vld [vmem:[%s0] sm:$0xff]
    %v16 = vld [vmem:[%s0 + $0x8] sm:$0xff]
    %v17 = vld [vmem:[%s1] sm:$0xff]
    %v18 = vld [vmem:[%s2] sm:$0xff]
    %20 = vset.pattern.permute.xlu0 0
    %21 = vperm.xlu0 %20, %v17
    %v22 = vpop.permute.xlu0 %21
    %v24 = vsub.f32 %v15, %v22
    %v25 = vsub.f32 %v16, %v22
    %27 = vset.pattern.permute.xlu0 0
    %28 = vperm.xlu0 %27, %v18
    %v29 = vpop.permute.xlu0 %28
    %v31 = vmul.f32 %v24, %v29
    %v32 = vmul.f32 %v25, %v29
    %33 = vst [vmem:[#allocation2] sm:$0xff] %v31
    %34 = vst [vmem:[#allocation2 + $0x8] sm:$0xff] %v32
    // Predicated region
    $region14: #{tpu_custom_call.1} parent=1 // pred_check
      _
    $region15: #{tpu_custom_call.1} parent=1 // pred_check_branch
      %36 = sbr.rel (0) target = $region17
    $region16: #{tpu_custom_call.1} parent=1 // pred_region
      %s38 = ssub.s32 256, 256
      %39 = vsyncadd [#allocation3], %s38
      %s41 = sshll.u32 [#allocation2], 4
      %s42 = int_to_ptr.vmem [resolvable:$true] %s41
      %44 = dma.vmem_to_hbm [thread:$0]  %s42, 256, %s3, [#allocation3]
    $region17: #{tpu_custom_call.1} parent=1 // pred_fallthru
      _
    // Predicated region
    $region18: #{tpu_custom_call.1} parent=1 // pred_check
      _
    $region19: #{tpu_custom_call.1} parent=1 // pred_check_branch
      %46 = sbr.rel (0) target = $region21
    $region20: #{tpu_custom_call.1} parent=1 // pred_region
      %47 = dma.done [#allocation3], 256
    $region21: #{tpu_custom_call.1} parent=1 // pred_fallthru
      _
    %48 = vsyncpa [#allocation3], 1

</llo_original>
